<compile_context>
chip_gen: v7x
topology: tpu7x:2x2x1
jax: 0.10.0
libtpu: 0.0.40
codegen_flags: <defaults>
</compile_context>

<pallas_src>
import jax
import jax.numpy as jnp
from jax.experimental import pallas as pl
from jax.experimental.pallas import tpu as pltpu


def _mish_kernel(x_ref, o_ref):
    # f32 compute (mandatory on v5e: no bf16 VPU/EUP).
    # TODO(synk): for bf16 inputs on v6e/v7x, bf16 compute would halve
    # EUP/VPU work per byte; kept in f32 for cross-generation accuracy.
    x = x_ref[...].astype(jnp.float32)
    # mish(x) = x * tanh(softplus(x)); with u = 1 + e^x:
    #   tanh(log u) = (u^2 - 1) / (u^2 + 1),  u^2 - 1 = e^x * (e^x + 2)
    # (no cancellation).  Clamp the exp argument: for x >= 20 the ratio is
    # exactly 1.0 in f32 (so the result is x), and nothing overflows to
    # inf/nan — den >= 2, so the divide is always safe.
    t = jnp.exp(jnp.minimum(x, 20.0))
    num = t * (t + 2.0)
    o_ref[...] = (x * (num / (num + 2.0))).astype(o_ref.dtype)


def _mish_jnp(x):
    # Exact same formula as torch reference, used for the tiny (<128 elem) tail.
    xf = x.astype(jnp.float32)
    return (xf * jnp.tanh(jax.nn.softplus(xf))).astype(x.dtype)


def _block_config():
    """(target_block_bytes, vmem_limit_bytes or None) tuned per TPU generation."""
    try:
        kind = jax.devices()[0].device_kind.lower()
    except Exception:
        kind = ""
    if "v7" in kind or "tpu7" in kind:
        # 3.2 TB/s per TC: 2 MiB steps lose ~20% to per-step overhead.
        # 4 buffers x 6 MiB = 24 MiB needs the scoped-VMEM limit raised
        # above the 32 MiB default (64 MiB physical).
        return 6 << 20, 48 << 20
    if "v6" in kind:
        # 32 MiB scoped default comfortably holds 4 x 4 MiB buffers.
        return 4 << 20, None
    # v5e (16 MiB scoped default) or unknown backend: stay conservative.
    return 2 << 20, None


def _pick_width(n):
    for w in (2048, 1024, 512, 256, 128):
        if n % w == 0:
            return w
    return 128


def _mish_2d(x2d, tile_rows, width, vmem_limit):
    rows = x2d.shape[0]
    grid = (pl.cdiv(rows, tile_rows),)  # ragged last block masked by Pallas
    cp_kwargs = dict(dimension_semantics=("parallel",))  # megacore sharding on v7x
    if vmem_limit is not None:
        cp_kwargs["vmem_limit_bytes"] = int(vmem_limit)
    return pl.pallas_call(
        _mish_kernel,
        out_shape=jax.ShapeDtypeStruct(x2d.shape, x2d.dtype),
        grid_spec=pltpu.PrefetchScalarGridSpec(
            num_scalar_prefetch=0,
            grid=grid,
            in_specs=[pl.BlockSpec((tile_rows, width), lambda i: (i, 0))],
            out_specs=pl.BlockSpec((tile_rows, width), lambda i: (i, 0)),
        ),
        compiler_params=pltpu.CompilerParams(**cp_kwargs),
    )(x2d)


def mish(x: jax.Array, *, target_block_bytes: int | None = None) -> jax.Array:
    """Elementwise Mish, matching torch: i * tanh(softplus(i)). Forward only."""
    orig_shape = x.shape
    total = x.size
    if total == 0:
        return x

    if target_block_bytes is None:
        target_block_bytes, vmem_limit = _block_config()
    else:
        vmem_limit = None

    x_flat = jnp.reshape(x, (-1,))

    # Largest 128-aligned prefix goes through the Pallas kernel; the tiny
    # tail (< 128 elements) is computed with plain jnp — no full-tensor
    # pad/slice passes on the awkward path.
    main = (total // 128) * 128
    if main == 0:
        return jnp.reshape(_mish_jnp(x_flat), orig_shape)

    width = _pick_width(main)           # lane-dense slab: largest of {2048..128}
    rows = main // width
    x_main = x_flat if main == total else x_flat[:main]
    x2d = jnp.reshape(x_main, (rows, width))

    # Block sizing: budget by the f32 compute footprint (kernel upcasts).
    block_elems = max(target_block_bytes // 4, 8 * width)
    tile_rows = max(8, (block_elems // width) // 8 * 8)

    # Guarantee >= MIN_STEPS grid steps (pipeline overlap + both v7x TCs)
    # whenever the row count allows it.
    MIN_STEPS = 4
    cap = -(-rows // MIN_STEPS)          # ceil(rows / MIN_STEPS)
    cap = max(8, -(-cap // 8) * 8)       # round up to a multiple of 8
    tile_rows = min(tile_rows, cap)

    if rows < 8:
        tile_rows = rows                 # full-extent block (sublane rule OK)
    else:
        tile_rows = min(tile_rows, (rows // 8) * 8)

    out2d = _mish_2d(x2d, tile_rows, width, vmem_limit)
    out_main = jnp.reshape(out2d, (-1,))

    if main == total:
        return jnp.reshape(out_main, orig_shape)

    out_tail = _mish_jnp(x_flat[main:])
    out_flat = jnp.concatenate([out_main, out_tail.astype(out_main.dtype)])
    return jnp.reshape(out_flat, orig_shape)


def _mish_ref(x):
    # Pure-JAX reference (same math as torch: i * tanh(softplus(i)))
    return x * jnp.tanh(jax.nn.softplus(x))


if __name__ == "__main__":
    key = jax.random.PRNGKey(0)

    # Primary shape from the module spec (NCHW, elementwise activation).
    x = jax.random.normal(key, (2, 4, 16, 16), dtype=jnp.float32)
    y = jax.block_until_ready(mish(x))
    assert y.shape == x.shape and y.dtype == x.dtype
    assert jnp.allclose(y, _mish_ref(x), atol=1e-5, rtol=1e-5)

    # Awkward size (not a multiple of 128) -> 128-aligned prefix + jnp tail.
    k2 = jax.random.fold_in(key, 1)
    x2 = 4.0 * jax.random.normal(k2, (3, 5, 17, 13), dtype=jnp.float32)
    y2 = jax.block_until_ready(mish(x2))
    assert jnp.allclose(y2, _mish_ref(x2), atol=1e-5, rtol=1e-5)

    # Larger size -> multi-block grid + pipelining (>= 4 grid steps).
    k3 = jax.random.fold_in(key, 2)
    x3 = 3.0 * jax.random.normal(k3, (8, 64, 64, 64), dtype=jnp.float32)
    y3 = jax.block_until_ready(mish(x3))
    assert jnp.allclose(y3, _mish_ref(x3), atol=1e-5, rtol=1e-5)

    print("KERNEL_OK")
</pallas_src>

<mosaic_0001>
module attributes {stable_mosaic.version = 11 : i64} {
  func.func @_mish_kernel(%arg0: i32, %arg1: memref<1x2048xf32, #tpu.memory_space<vmem>>, %arg2: memref<1x2048xf32, #tpu.memory_space<vmem>>) attributes {dimension_semantics = [#tpu.dimension_semantics<parallel>], iteration_bounds = array<i64: 1>, scalar_prefetch = 0 : i64, scratch_operands = 0 : i64, tpu.core_type = #tpu.core_type<tc>, window_params = [{transform_indices = @transform_0, window_bounds = array<i64: 1, 2048>}, {transform_indices = @transform_1, window_bounds = array<i64: 1, 2048>}]} {
    %c0 = arith.constant 0 : index
    %c0_0 = arith.constant 0 : index
    %0 = vector.load %arg1[%c0, %c0_0] : memref<1x2048xf32, #tpu.memory_space<vmem>>, vector<1x2048xf32>
    %cst = arith.constant 2.000000e+01 : f32
    %1 = vector.broadcast %cst : f32 to vector<1x2048xf32>
    %2 = arith.minimumf %0, %1 : vector<1x2048xf32>
    %3 = math.exp %2 : vector<1x2048xf32>
    %cst_1 = arith.constant 2.000000e+00 : f32
    %4 = vector.broadcast %cst_1 : f32 to vector<1x2048xf32>
    %5 = arith.addf %3, %4 : vector<1x2048xf32>
    %6 = arith.mulf %3, %5 : vector<1x2048xf32>
    %cst_2 = arith.constant 2.000000e+00 : f32
    %7 = vector.broadcast %cst_2 : f32 to vector<1x2048xf32>
    %8 = arith.addf %6, %7 : vector<1x2048xf32>
    %9 = arith.divf %6, %8 : vector<1x2048xf32>
    %10 = arith.mulf %0, %9 : vector<1x2048xf32>
    %c0_3 = arith.constant 0 : index
    %c0_4 = arith.constant 0 : index
    %11 = vector.load %arg2[%c0_3, %c0_4] : memref<1x2048xf32, #tpu.memory_space<vmem>>, vector<1x2048xf32>
    tpu.vector_store %arg2[%c0_3, %c0_4], %10 {strides = array<i32>} : memref<1x2048xf32, #tpu.memory_space<vmem>>, vector<1x2048xf32>,
    return
  }
  func.func @transform_0(%arg0: i32) -> (i32, i32) {
    %c0_i32 = arith.constant 0 : i32
    %c0_i32_0 = arith.constant 0 : i32
    return %arg0, %c0_i32 : i32, i32
  }
  func.func @transform_1(%arg0: i32) -> (i32, i32) {
    %c0_i32 = arith.constant 0 : i32
    %c0_i32_0 = arith.constant 0 : i32
    return %arg0, %c0_i32 : i32, i32
  }
}

</mosaic_0001>

<llo_original>
// kernel: tpu_custom_call.1
$region0: #{tpu_custom_call.1}
  #allocation0 [shape = 'u32[]', space=smem, size = 0x4, offset = 0x4, fixed_abs, tag = 'smem constant byte address 0x4 - core index']
  #allocation1 [shape = 'u32[144,128]{1,0:T(1,128)}', space=vmem, size = 0x12000, scoped, tag = 'internal scratch']
  %s0 = inlined_call_operand.hbm [shape: f32[1,2048], index: 0, kind: input, shape index: {}]
  %s1 = inlined_call_operand.hbm [shape: f32[1,2048], index: 1, kind: output, shape index: {}]
  %s2 = sld [smem:[#allocation0]]
  $region18: #{tpu_custom_call.1} parent=0
    _
  %s4 = ssub.s32 1, %s2
  %s5 = scalar_select 0, %s4, %s2
  $region1: #{tpu_custom_call.1} parent=0
    #allocation2 [shape = 'u8[8192]{0}', space=vmem, size = 0x2000, scoped, tag = 'input window, operand 0, single buffered']
    #allocation3 [shape = 's32[1]{0}', space=sflag, size = 0x4, scoped, tag = 'scoped memory for tpu_custom_call.1']
    #allocation4 [shape = 's32[1]{0}', space=sflag, size = 0x4, scoped, tag = 'scoped memory for tpu_custom_call.1']
    #allocation5 [shape = 'u8[8192]{0}', space=vmem, size = 0x2000, scoped, tag = 'output window, operand 0, single buffered']
    %6 = vsyncpa [#allocation3], 0
    %7 = vsyncpa [#allocation4], 0
    // Predicated region
    $region2: #{tpu_custom_call.1} parent=1 // pred_check
      _
    $region3: #{tpu_custom_call.1} parent=1 // pred_check_branch
      %9 = sbr.rel (0) target = $region5
    $region4: #{tpu_custom_call.1} parent=1 // pred_region
      %s11 = ssub.s32 256, 256
      %12 = vsyncadd [#allocation3], %s11
      %s14 = sshll.u32 [#allocation2], 4
      %s15 = int_to_ptr.vmem [resolvable:$true] %s14
      %17 = dma.hbm_to_vmem [thread:$0]  %s0, 256, %s15, [#allocation3]
    $region5: #{tpu_custom_call.1} parent=1 // pred_fallthru
      _
    // Predicated region
    $region6: #{tpu_custom_call.1} parent=1 // pred_check
      _
    $region7: #{tpu_custom_call.1} parent=1 // pred_check_branch
      %19 = sbr.rel (0) target = $region9
    $region8: #{tpu_custom_call.1} parent=1 // pred_region
      %20 = dma.done [#allocation3], 256
    $region9: #{tpu_custom_call.1} parent=1 // pred_fallthru
      _
    %v21 = vld [vmem:[#allocation2] sm:$0xff]
    %v22 = vld [vmem:[#allocation2 + $0x8] sm:$0xff]
    %v23 = vmin.f32 %v21, 20.0
    %v24 = vmin.f32 %v22, 20.0
    %v25 = vmul.f32 %v23, 1.442695
    %v26 = vpow.pop %v25
    %v27 = vmul.f32 %v24, 1.442695
    %v28 = vpow.pop %v27
    %v29 = vadd.f32 %v26, 2.0
    %v30 = vadd.f32 %v28, 2.0
    %v31 = vmul.f32 %v26, %v29
    %v32 = vmul.f32 %v28, %v30
    %v33 = vadd.f32 %v31, 2.0
    %v34 = vadd.f32 %v32, 2.0
    %v35 = vrcp.pop %v33
    %v36 = vmul.f32 %v31, %v35
    %v37 = vrcp.pop %v34
    %v38 = vmul.f32 %v32, %v37
    %v39 = vmul.f32 %v21, %v36
    %v40 = vmul.f32 %v22, %v38
    %41 = vst [vmem:[#allocation5] sm:$0xff] %v39
    %42 = vst [vmem:[#allocation5 + $0x8] sm:$0xff] %v40
    // Predicated region
    $region10: #{tpu_custom_call.1} parent=1 // pred_check
      _
    $region11: #{tpu_custom_call.1} parent=1 // pred_check_branch
      %44 = sbr.rel (0) target = $region13
    $region12: #{tpu_custom_call.1} parent=1 // pred_region
      %s46 = ssub.s32 256, 256
      %47 = vsyncadd [#allocation4], %s46
      %s49 = sshll.u32 [#allocation5], 4
      %s50 = int_to_ptr.vmem [resolvable:$true] %s49
      %52 = dma.vmem_to_hbm [thread:$0]  %s50, 256, %s1, [#allocation4]
    $region13: #{tpu_custom_call.1} parent=1 // pred_fallthru
      _
    // Predicated region
    $region14: #{tpu_custom_call.1} parent=1 // pred_check
      _
    $region15: #{tpu_custom_call.1} parent=1 // pred_check_branch
      %54 = sbr.rel (0) target = $region17
    $region16: #{tpu_custom_call.1} parent=1 // pred_region
      %55 = dma.done [#allocation4], 256
    $region17: #{tpu_custom_call.1} parent=1 // pred_fallthru
      _
    %56 = vsyncpa [#allocation3], 1
    %57 = vsyncpa [#allocation4], 1

</llo_original>
